<compile_context>
chip_gen: v6e
topology: v6e:2x2x1
jax: 0.10.0
libtpu: 0.0.40
codegen_flags: <defaults>
</compile_context>

<pallas_src>
import math

import jax
import jax.numpy as jnp
from jax import lax
from jax.experimental import pallas as pl
from jax.experimental.pallas import tpu as pltpu

LN_EPS = 1e-5
_INV_SQRT2 = 1.0 / math.sqrt(2.0)


def _round_up(x, m):
    return ((x + m - 1) // m) * m


def _ffn_kernel(x_ref, g_ref, bln_ref, w1_ref, b1_ref, w2_ref, b2_ref, o_ref,
                xn_ref):
    k = pl.program_id(1)

    # Once per row tile: LayerNorm (f32 stats) + init the output accumulator
    # with the second bias (so no finalize step is needed).
    @pl.when(k == 0)
    def _():
        x = x_ref[...].astype(jnp.float32)                       # (tm, dim)
        mean = jnp.mean(x, axis=-1, keepdims=True)
        cen = x - mean
        var = jnp.mean(cen * cen, axis=-1, keepdims=True)
        scale = lax.rsqrt(var + LN_EPS) * g_ref[...]              # fuse gamma
        xn = cen * scale + bln_ref[...]
        xn_ref[...] = xn.astype(xn_ref.dtype)                     # bf16 / f32
        o_ref[...] = jnp.broadcast_to(b2_ref[...], o_ref.shape).astype(o_ref.dtype)

    # Hidden-tile step: h_k = GELU(xn @ W1[:, k] + b1[k]); o += h_k @ W2[k, :]
    h = jnp.dot(xn_ref[...], w1_ref[...], preferred_element_type=jnp.float32)
    h = h + b1_ref[...]
    # Exact (erf) GELU, matching torch.nn.GELU(approximate='none').
    h = 0.5 * h * (1.0 + lax.erf(h * _INV_SQRT2))
    o_ref[...] += jnp.dot(h.astype(w2_ref.dtype), w2_ref[...],
                          preferred_element_type=jnp.float32)
    # Dropout(p=0.0) is identity.


def feed_forward(x, params, *, tm=256, tk=512, compute_dtype=jnp.bfloat16):
    """x: (batch, seq, dim). Returns (batch, seq, dim) in x.dtype."""
    gamma, beta, w1, b1, w2, b2 = params
    B, S, dim = x.shape
    hidden = w1.shape[1]
    M = B * S

    # Effective row tile: big for real workloads, shrunk (sublane-aligned) for
    # tiny ones; rows padded to a multiple of the tile.
    tm_eff = min(tm, _round_up(M, 8))
    Mp = _round_up(M, tm_eff)

    # Effective hidden tile: full hidden (single step) or a 128-multiple chunk;
    # hidden zero-padded (zero cols of W1 / zero b1 / zero rows of W2 give an
    # exactly-zero contribution).
    if hidden <= tk:
        tk_eff = hidden
    else:
        assert tk % 128 == 0, "hidden tile must be a multiple of 128"
        tk_eff = tk
    Hp = _round_up(hidden, tk_eff)

    x2d = x.reshape(M, dim).astype(jnp.float32)
    if Mp != M:
        x2d = jnp.pad(x2d, ((0, Mp - M), (0, 0)))

    w1c = w1.astype(compute_dtype)
    w2c = w2.astype(compute_dtype)
    b1f = b1.astype(jnp.float32)
    if Hp != hidden:
        w1c = jnp.pad(w1c, ((0, 0), (0, Hp - hidden)))
        b1f = jnp.pad(b1f, (0, Hp - hidden))
        w2c = jnp.pad(w2c, ((0, Hp - hidden), (0, 0)))

    g2d = gamma.reshape(1, dim).astype(jnp.float32)
    bln2d = beta.reshape(1, dim).astype(jnp.float32)
    b1_2d = b1f.reshape(1, Hp)
    b2_2d = b2.reshape(1, dim).astype(jnp.float32)

    grid = (Mp // tm_eff, Hp // tk_eff)

    # Rough VMEM budget (double-buffered blocks + scratch) -> scoped limit.
    isz = jnp.dtype(compute_dtype).itemsize
    vmem_est = (2 * tm_eff * dim * 4            # x blocks
                + 2 * dim * tk_eff * isz        # W1 tiles
                + 2 * tk_eff * dim * isz        # W2 tiles
                + 2 * tm_eff * dim * 4          # output (f32 accumulator) blocks
                + 2 * (2 * dim + tk_eff + dim) * 4   # gamma/beta/b1/b2
                + tm_eff * dim * isz)           # xn scratch
    vmem_limit = int(min(max(2 * vmem_est, 32 * 1024 * 1024), 64 * 1024 * 1024))

    out = pl.pallas_call(
        _ffn_kernel,
        out_shape=jax.ShapeDtypeStruct((Mp, dim), jnp.float32),
        grid_spec=pltpu.PrefetchScalarGridSpec(
            num_scalar_prefetch=0,
            grid=grid,
            in_specs=[
                pl.BlockSpec((tm_eff, dim), lambda i, k: (i, 0)),     # x rows
                pl.BlockSpec((1, dim), lambda i, k: (0, 0)),          # gamma
                pl.BlockSpec((1, dim), lambda i, k: (0, 0)),          # beta
                pl.BlockSpec((dim, tk_eff), lambda i, k: (0, k)),     # W1 tile
                pl.BlockSpec((1, tk_eff), lambda i, k: (0, k)),       # b1 tile
                pl.BlockSpec((tk_eff, dim), lambda i, k: (k, 0)),     # W2 tile
                pl.BlockSpec((1, dim), lambda i, k: (0, 0)),          # b2
            ],
            out_specs=pl.BlockSpec((tm_eff, dim), lambda i, k: (i, 0)),
            scratch_shapes=[
                pltpu.VMEM((tm_eff, dim), compute_dtype),   # LayerNorm'ed rows
            ],
        ),
        compiler_params=pltpu.CompilerParams(
            dimension_semantics=("parallel", "arbitrary"),
            vmem_limit_bytes=vmem_limit,
        ),
    )(x2d, g2d, bln2d, w1c, b1_2d, w2c, b2_2d)

    return out[:M].reshape(B, S, dim).astype(x.dtype)


def init_params(key, dim, hidden_dim):
    """Deterministic init mirroring the PyTorch module's parameter shapes."""
    k1, k2, k3, k4 = jax.random.split(key, 4)
    gamma = jnp.ones((dim,), jnp.float32)               # LayerNorm defaults
    beta = jnp.zeros((dim,), jnp.float32)
    lim1 = 1.0 / math.sqrt(dim)
    w1 = jax.random.uniform(k1, (dim, hidden_dim), jnp.float32, -lim1, lim1)
    b1 = jax.random.uniform(k2, (hidden_dim,), jnp.float32, -lim1, lim1)
    lim2 = 1.0 / math.sqrt(hidden_dim)
    w2 = jax.random.uniform(k3, (hidden_dim, dim), jnp.float32, -lim2, lim2)
    b2 = jax.random.uniform(k4, (dim,), jnp.float32, -lim2, lim2)
    return gamma, beta, w1, b1, w2, b2


def _reference(x, params):
    gamma, beta, w1, b1, w2, b2 = params
    mean = jnp.mean(x, axis=-1, keepdims=True)
    var = jnp.mean((x - mean) ** 2, axis=-1, keepdims=True)
    xn = (x - mean) / jnp.sqrt(var + LN_EPS) * gamma + beta
    h = xn @ w1 + b1
    h = 0.5 * h * (1.0 + lax.erf(h / math.sqrt(2.0)))
    return h @ w2 + b2


if __name__ == "__main__":
    key = jax.random.PRNGKey(0)
    kx, kp, krest = jax.random.split(key, 3)

    # Test 1: small but lane-dense shapes; bf16 MXU path and f32 path.
    B, S, DIM, HIDDEN = 2, 8, 128, 256
    x = jax.random.normal(kx, (B, S, DIM), jnp.float32)
    params = init_params(kp, DIM, HIDDEN)
    y_ref = _reference(x, params)

    y_bf16 = jax.block_until_ready(feed_forward(x, params))
    assert jnp.allclose(y_bf16, y_ref, atol=5e-2, rtol=5e-2), "bf16 path mismatch"

    y_f32 = jax.block_until_ready(
        feed_forward(x, params, compute_dtype=jnp.float32))
    assert jnp.allclose(y_f32, y_ref, atol=1e-3, rtol=1e-3), "f32 path mismatch"

    # Test 2: ragged shapes exercising row padding, hidden padding and the
    # multi-step hidden reduction axis.
    B2, S2, DIM2, HIDDEN2 = 2, 5, 64, 640
    kx2, kp2 = jax.random.split(krest)
    x2 = jax.random.normal(kx2, (B2, S2, DIM2), jnp.float32)
    params2 = init_params(kp2, DIM2, HIDDEN2)
    y2 = jax.block_until_ready(
        feed_forward(x2, params2, compute_dtype=jnp.float32))
    y2_ref = _reference(x2, params2)
    assert jnp.allclose(y2, y2_ref, atol=1e-3, rtol=1e-3), "padded path mismatch"

    print("KERNEL_OK")
</pallas_src>

<mosaic_0001>
module attributes {stable_mosaic.version = 11 : i64} {
  func.func @_ffn_kernel(%arg0: i32, %arg1: i32, %arg2: memref<16x128xf32, #tpu.memory_space<vmem>>, %arg3: memref<1x128xf32, #tpu.memory_space<vmem>>, %arg4: memref<1x128xf32, #tpu.memory_space<vmem>>, %arg5: memref<128x256xbf16, #tpu.memory_space<vmem>>, %arg6: memref<1x256xf32, #tpu.memory_space<vmem>>, %arg7: memref<256x128xbf16, #tpu.memory_space<vmem>>, %arg8: memref<1x128xf32, #tpu.memory_space<vmem>>, %arg9: memref<16x128xf32, #tpu.memory_space<vmem>>, %arg10: memref<16x128xbf16, #tpu.memory_space<vmem>>) attributes {dimension_semantics = [#tpu.dimension_semantics<parallel>, #tpu.dimension_semantics<arbitrary>], iteration_bounds = array<i64: 1, 1>, scalar_prefetch = 0 : i64, scratch_operands = 1 : i64, tpu.core_type = #tpu.core_type<tc>, window_params = [{transform_indices = @transform_0, window_bounds = array<i64: 16, 128>}, {pipeline_mode = #tpu.pipeline_mode<synchronous>, transform_indices = @transform_1, window_bounds = array<i64: 1, 128>}, {pipeline_mode = #tpu.pipeline_mode<synchronous>, transform_indices = @transform_2, window_bounds = array<i64: 1, 128>}, {transform_indices = @transform_3, window_bounds = array<i64: 128, 256>}, {transform_indices = @transform_4, window_bounds = array<i64: 1, 256>}, {transform_indices = @transform_5, window_bounds = array<i64: 256, 128>}, {pipeline_mode = #tpu.pipeline_mode<synchronous>, transform_indices = @transform_6, window_bounds = array<i64: 1, 128>}, {transform_indices = @transform_7, window_bounds = array<i64: 16, 128>}]} {
    %c0_i32 = arith.constant 0 : i32
    %0 = arith.cmpi eq, %arg1, %c0_i32 : i32
    %1 = arith.extui %0 : i1 to i32
    %c0_i32_0 = arith.constant 0 : i32
    %2 = arith.cmpi ne, %1, %c0_i32_0 : i32
    scf.if %2 {
      %c0_16 = arith.constant 0 : index
      %c0_17 = arith.constant 0 : index
      %23 = vector.load %arg2[%c0_16, %c0_17] : memref<16x128xf32, #tpu.memory_space<vmem>>, vector<16x128xf32>
      %cst_18 = arith.constant dense<0.000000e+00> : vector<16xf32>
      %24 = vector.multi_reduction <add>, %23, %cst_18 [1] : vector<16x128xf32> to vector<16xf32>
      %25 = vector.shape_cast %24 : vector<16xf32> to vector<16x1xf32>
      %cst_19 = arith.constant 1.280000e+02 : f32
      %26 = vector.broadcast %cst_19 : f32 to vector<16x1xf32>
      %27 = arith.divf %25, %26 : vector<16x1xf32>
      %28 = vector.broadcast %27 : vector<16x1xf32> to vector<16x128xf32>
      %29 = arith.subf %23, %28 : vector<16x128xf32>
      %30 = arith.mulf %29, %29 : vector<16x128xf32>
      %cst_20 = arith.constant dense<0.000000e+00> : vector<16xf32>
      %31 = vector.multi_reduction <add>, %30, %cst_20 [1] : vector<16x128xf32> to vector<16xf32>
      %32 = vector.shape_cast %31 : vector<16xf32> to vector<16x1xf32>
      %cst_21 = arith.constant 1.280000e+02 : f32
      %33 = vector.broadcast %cst_21 : f32 to vector<16x1xf32>
      %34 = arith.divf %32, %33 : vector<16x1xf32>
      %cst_22 = arith.constant 9.99999974E-6 : f32
      %35 = vector.broadcast %cst_22 : f32 to vector<16x1xf32>
      %36 = arith.addf %34, %35 : vector<16x1xf32>
      %37 = math.rsqrt %36 : vector<16x1xf32>
      %c0_23 = arith.constant 0 : index
      %c0_24 = arith.constant 0 : index
      %38 = vector.load %arg3[%c0_23, %c0_24] : memref<1x128xf32, #tpu.memory_space<vmem>>, vector<1x128xf32>
      %39 = vector.broadcast %37 : vector<16x1xf32> to vector<16x128xf32>
      %40 = vector.broadcast %38 : vector<1x128xf32> to vector<16x128xf32>
      %41 = arith.mulf %39, %40 : vector<16x128xf32>
      %42 = arith.mulf %29, %41 : vector<16x128xf32>
      %c0_25 = arith.constant 0 : index
      %c0_26 = arith.constant 0 : index
      %43 = vector.load %arg4[%c0_25, %c0_26] : memref<1x128xf32, #tpu.memory_space<vmem>>, vector<1x128xf32>
      %44 = vector.broadcast %43 : vector<1x128xf32> to vector<16x128xf32>
      %45 = arith.addf %42, %44 : vector<16x128xf32>
      %46 = arith.truncf %45 : vector<16x128xf32> to vector<16x128xbf16>
      %c0_27 = arith.constant 0 : index
      %c0_28 = arith.constant 0 : index
      %47 = vector.load %arg10[%c0_27, %c0_28] : memref<16x128xbf16, #tpu.memory_space<vmem>>, vector<16x128xbf16>
      tpu.vector_store %arg10[%c0_27, %c0_28], %46 {strides = array<i32>} : memref<16x128xbf16, #tpu.memory_space<vmem>>, vector<16x128xbf16>,
      %c0_29 = arith.constant 0 : index
      %c0_30 = arith.constant 0 : index
      %48 = vector.load %arg8[%c0_29, %c0_30] : memref<1x128xf32, #tpu.memory_space<vmem>>, vector<1x128xf32>
      %49 = vector.shape_cast %48 : vector<1x128xf32> to vector<1x128xf32>
      %50 = vector.broadcast %49 : vector<1x128xf32> to vector<16x128xf32>
      %c0_31 = arith.constant 0 : index
      %c0_32 = arith.constant 0 : index
      %51 = vector.load %arg9[%c0_31, %c0_32] : memref<16x128xf32, #tpu.memory_space<vmem>>, vector<16x128xf32>
      tpu.vector_store %arg9[%c0_31, %c0_32], %50 {strides = array<i32>} : memref<16x128xf32, #tpu.memory_space<vmem>>, vector<16x128xf32>,
    } else {
    }
    %c0 = arith.constant 0 : index
    %c0_1 = arith.constant 0 : index
    %3 = vector.load %arg10[%c0, %c0_1] : memref<16x128xbf16, #tpu.memory_space<vmem>>, vector<16x128xbf16>
    %c0_2 = arith.constant 0 : index
    %c0_3 = arith.constant 0 : index
    %4 = vector.load %arg5[%c0_2, %c0_3] : memref<128x256xbf16, #tpu.memory_space<vmem>>, vector<128x256xbf16>
    %cst = arith.constant dense<0.000000e+00> : vector<16x256xf32>
    %5 = tpu.matmul %3, %4, %cst {dimension_numbers = #tpu.dot_dimension_numbers<[1], [0], [0], [1], [0, 0, 1, 1], [], []>} : vector<16x128xbf16>, vector<128x256xbf16>, vector<16x256xf32> -> vector<16x256xf32>
    %c0_4 = arith.constant 0 : index
    %c0_5 = arith.constant 0 : index
    %6 = vector.load %arg6[%c0_4, %c0_5] : memref<1x256xf32, #tpu.memory_space<vmem>>, vector<1x256xf32>
    %7 = vector.broadcast %6 : vector<1x256xf32> to vector<16x256xf32>
    %8 = arith.addf %5, %7 : vector<16x256xf32>
    %cst_6 = arith.constant 5.000000e-01 : f32
    %9 = vector.broadcast %cst_6 : f32 to vector<16x256xf32>
    %10 = arith.mulf %9, %8 : vector<16x256xf32>
    %cst_7 = arith.constant 0.707106769 : f32
    %11 = vector.broadcast %cst_7 : f32 to vector<16x256xf32>
    %12 = arith.mulf %8, %11 : vector<16x256xf32>
    %13 = math.erf %12 : vector<16x256xf32>
    %cst_8 = arith.constant 1.000000e+00 : f32
    %14 = vector.broadcast %cst_8 : f32 to vector<16x256xf32>
    %15 = arith.addf %14, %13 : vector<16x256xf32>
    %16 = arith.mulf %10, %15 : vector<16x256xf32>
    %c0_9 = arith.constant 0 : index
    %c0_10 = arith.constant 0 : index
    %17 = vector.load %arg9[%c0_9, %c0_10] : memref<16x128xf32, #tpu.memory_space<vmem>>, vector<16x128xf32>
    %18 = arith.truncf %16 : vector<16x256xf32> to vector<16x256xbf16>
    %c0_11 = arith.constant 0 : index
    %c0_12 = arith.constant 0 : index
    %19 = vector.load %arg7[%c0_11, %c0_12] : memref<256x128xbf16, #tpu.memory_space<vmem>>, vector<256x128xbf16>
    %cst_13 = arith.constant dense<0.000000e+00> : vector<16x128xf32>
    %20 = tpu.matmul %18, %19, %cst_13 {dimension_numbers = #tpu.dot_dimension_numbers<[1], [0], [0], [1], [0, 0, 1, 1], [], []>} : vector<16x256xbf16>, vector<256x128xbf16>, vector<16x128xf32> -> vector<16x128xf32>
    %21 = arith.addf %17, %20 : vector<16x128xf32>
    %c0_14 = arith.constant 0 : index
    %c0_15 = arith.constant 0 : index
    %22 = vector.load %arg9[%c0_14, %c0_15] : memref<16x128xf32, #tpu.memory_space<vmem>>, vector<16x128xf32>
    tpu.vector_store %arg9[%c0_14, %c0_15], %21 {strides = array<i32>} : memref<16x128xf32, #tpu.memory_space<vmem>>, vector<16x128xf32>,
    return
  }
  func.func @transform_0(%arg0: i32, %arg1: i32) -> (i32, i32) {
    %c0_i32 = arith.constant 0 : i32
    %c0_i32_0 = arith.constant 0 : i32
    return %arg0, %c0_i32 : i32, i32
  }
  func.func @transform_1(%arg0: i32, %arg1: i32) -> (i32, i32) {
    %c0_i32 = arith.constant 0 : i32
    %c0_i32_0 = arith.constant 0 : i32
    %c0_i32_1 = arith.constant 0 : i32
    return %c0_i32, %c0_i32_0 : i32, i32
  }
  func.func @transform_2(%arg0: i32, %arg1: i32) -> (i32, i32) {
    %c0_i32 = arith.constant 0 : i32
    %c0_i32_0 = arith.constant 0 : i32
    %c0_i32_1 = arith.constant 0 : i32
    return %c0_i32, %c0_i32_0 : i32, i32
  }
  func.func @transform_3(%arg0: i32, %arg1: i32) -> (i32, i32) {
    %c0_i32 = arith.constant 0 : i32
    %c0_i32_0 = arith.constant 0 : i32
    return %c0_i32, %arg1 : i32, i32
  }
  func.func @transform_4(%arg0: i32, %arg1: i32) -> (i32, i32) {
    %c0_i32 = arith.constant 0 : i32
    %c0_i32_0 = arith.constant 0 : i32
    return %c0_i32, %arg1 : i32, i32
  }
  func.func @transform_5(%arg0: i32, %arg1: i32) -> (i32, i32) {
    %c0_i32 = arith.constant 0 : i32
    %c0_i32_0 = arith.constant 0 : i32
    return %arg1, %c0_i32 : i32, i32
  }
  func.func @transform_6(%arg0: i32, %arg1: i32) -> (i32, i32) {
    %c0_i32 = arith.constant 0 : i32
    %c0_i32_0 = arith.constant 0 : i32
    %c0_i32_1 = arith.constant 0 : i32
    return %c0_i32, %c0_i32_0 : i32, i32
  }
  func.func @transform_7(%arg0: i32, %arg1: i32) -> (i32, i32) {
    %c0_i32 = arith.constant 0 : i32
    %c0_i32_0 = arith.constant 0 : i32
    return %arg0, %c0_i32 : i32, i32
  }
}

</mosaic_0001>

<llo_original>
// kernel: tpu_custom_call.1
$region0: #{tpu_custom_call.1}
  #allocation0 [shape = 'u32[]', space=smem, size = 0x4, offset = 0x4, fixed_abs, tag = 'smem constant byte address 0x4 - core index']
  #allocation1 [shape = 'u32[144,128]{1,0:T(1,128)}', space=vmem, size = 0x12000, scoped, tag = 'internal scratch']
  #allocation2 [shape = 'bf16[16,128]{1,0:T(8,128)(2,1)}', space=vmem, size = 0x1000, scoped, tag = 'scratch operand']
  %s0 = inlined_call_operand.hbm [shape: f32[16,128], index: 0, kind: input, shape index: {}]
  %s1 = inlined_call_operand.vmem [shape: f32[1,128], index: 1, kind: input, shape index: {}]
  %s2 = inlined_call_operand.hbm [shape: f32[1,128], index: 2, kind: input, shape index: {}]
  %s3 = inlined_call_operand.hbm [shape: bf16[128,256], index: 3, kind: input, shape index: {}]
  %s4 = inlined_call_operand.vmem [shape: f32[1,256], index: 4, kind: input, shape index: {}]
  %s5 = inlined_call_operand.hbm [shape: bf16[256,128], index: 5, kind: input, shape index: {}]
  %s6 = inlined_call_operand.vmem [shape: f32[1,128], index: 6, kind: input, shape index: {}]
  %s7 = inlined_call_operand.hbm [shape: f32[16,128], index: 7, kind: output, shape index: {}]
  %s8 = sld [smem:[#allocation0]]
  $region58: #{tpu_custom_call.1} parent=0
    _
  %s10 = ssub.s32 1, %s8
  %s11 = scalar_select 0, %s10, %s8
  $region1: #{tpu_custom_call.1} parent=0
    #allocation3 [shape = 'u8[8192]{0}', space=vmem, size = 0x2000, scoped, tag = 'input window, operand 0, single buffered']
    #allocation4 [shape = 's32[1]{0}', space=sflag, size = 0x4, scoped, tag = 'scoped memory for tpu_custom_call.1']
    #allocation5 [shape = 's32[1]{0}', space=sflag, size = 0x4, scoped, tag = 'scoped memory for tpu_custom_call.1']
    #allocation6 [shape = 'u8[512]{0}', space=vmem, size = 0x400, scoped, tag = 'input window, operand 2, single buffered']
    #allocation7 [shape = 's32[1]{0}', space=sflag, size = 0x4, scoped, tag = 'scoped memory for tpu_custom_call.1']
    #allocation8 [shape = 'u8[65536]{0}', space=vmem, size = 0x10000, scoped, tag = 'input window, operand 3, single buffered']
    #allocation9 [shape = 'u8[65536]{0}', space=vmem, size = 0x10000, scoped, tag = 'input window, operand 5, single buffered']
    #allocation10 [shape = 's32[1]{0}', space=sflag, size = 0x4, scoped, tag = 'scoped memory for tpu_custom_call.1']
    #allocation11 [shape = 'u8[8192]{0}', space=vmem, size = 0x2000, scoped, tag = 'output window, operand 0, single buffered']
    %12 = vsyncpa [#allocation4], 0
    %13 = vsyncpa [#allocation7], 0
    %14 = vsyncpa [#allocation10], 0
    %15 = vsyncpa [#allocation5], 0
    // Predicated region
    $region2: #{tpu_custom_call.1} parent=1 // pred_check
      _
    $region3: #{tpu_custom_call.1} parent=1 // pred_check_branch
      %17 = sbr.rel (0) target = $region5
    $region4: #{tpu_custom_call.1} parent=1 // pred_region
      %s19 = ssub.s32 256, 256
      %20 = vsyncadd [#allocation4], %s19
      %s21 = sshll.u32 [#allocation3], 4
      %s22 = int_to_ptr.vmem [resolvable:$true] %s21
      %27 = dma.hbm_to_vmem [thread:$0]  %s0, 256, %s22, [#allocation4], 128, 128, 8
    $region5: #{tpu_custom_call.1} parent=1 // pred_fallthru
      _
    // Predicated region
    $region6: #{tpu_custom_call.1} parent=1 // pred_check
      _
    $region7: #{tpu_custom_call.1} parent=1 // pred_check_branch
      %29 = sbr.rel (0) target = $region9
    $region8: #{tpu_custom_call.1} parent=1 // pred_region
      _
    $region9: #{tpu_custom_call.1} parent=1 // pred_fallthru
      _
    // Predicated region
    $region10: #{tpu_custom_call.1} parent=1 // pred_check
      _
    $region11: #{tpu_custom_call.1} parent=1 // pred_check_branch
      %31 = sbr.rel (0) target = $region13
    $region12: #{tpu_custom_call.1} parent=1 // pred_region
      %s33 = ssub.s32 16, 16
      %34 = vsyncadd [#allocation7], %s33
      %s36 = sshll.u32 [#allocation6], 4
      %s37 = int_to_ptr.vmem [resolvable:$true] %s36
      %39 = dma.hbm_to_vmem [thread:$0]  %s2, 16, %s37, [#allocation7]
    $region13: #{tpu_custom_call.1} parent=1 // pred_fallthru
      _
    // Predicated region
    $region14: #{tpu_custom_call.1} parent=1 // pred_check
      _
    $region15: #{tpu_custom_call.1} parent=1 // pred_check_branch
      %41 = sbr.rel (0) target = $region17
    $region16: #{tpu_custom_call.1} parent=1 // pred_region
      %s43 = ssub.s32 2048, 2048
      %44 = vsyncadd [#allocation7], %s43
      %s45 = sshll.u32 [#allocation8], 4
      %s46 = int_to_ptr.vmem [resolvable:$true] %s45
      %51 = dma.hbm_to_vmem [thread:$0]  %s3, 2048, %s46, [#allocation7], 128, 128, 8
    $region17: #{tpu_custom_call.1} parent=1 // pred_fallthru
      _
    // Predicated region
    $region18: #{tpu_custom_call.1} parent=1 // pred_check
      _
    $region19: #{tpu_custom_call.1} parent=1 // pred_check_branch
      %53 = sbr.rel (0) target = $region21
    $region20: #{tpu_custom_call.1} parent=1 // pred_region
      _
    $region21: #{tpu_custom_call.1} parent=1 // pred_fallthru
      _
    // Predicated region
    $region22: #{tpu_custom_call.1} parent=1 // pred_check
      _
    $region23: #{tpu_custom_call.1} parent=1 // pred_check_branch
      %55 = sbr.rel (0) target = $region25
    $region24: #{tpu_custom_call.1} parent=1 // pred_region
      %s57 = ssub.s32 2048, 2048
      %58 = vsyncadd [#allocation10], %s57
      %s59 = sshll.u32 [#allocation9], 4
      %s60 = int_to_ptr.vmem [resolvable:$true] %s59
      %65 = dma.hbm_to_vmem [thread:$0]  %s5, 2048, %s60, [#allocation10], 64, 64, 4
    $region25: #{tpu_custom_call.1} parent=1 // pred_fallthru
      _
    // Predicated region
    $region26: #{tpu_custom_call.1} parent=1 // pred_check
      _
    $region27: #{tpu_custom_call.1} parent=1 // pred_check_branch
      %67 = sbr.rel (0) target = $region29
    $region28: #{tpu_custom_call.1} parent=1 // pred_region
      _
    $region29: #{tpu_custom_call.1} parent=1 // pred_fallthru
      _
    // Predicated region
    $region30: #{tpu_custom_call.1} parent=1 // pred_check
      _
    $region31: #{tpu_custom_call.1} parent=1 // pred_check_branch
      %69 = sbr.rel (0) target = $region33
    $region32: #{tpu_custom_call.1} parent=1 // pred_region
      %70 = dma.done [#allocation4], 256
    $region33: #{tpu_custom_call.1} parent=1 // pred_fallthru
      _
    // Predicated region
    $region34: #{tpu_custom_call.1} parent=1 // pred_check
      _
    $region35: #{tpu_custom_call.1} parent=1 // pred_check_branch
      %72 = sbr.rel (0) target = $region37
    $region36: #{tpu_custom_call.1} parent=1 // pred_region
      %73 = dma.done [#allocation7], 16
    $region37: #{tpu_custom_call.1} parent=1 // pred_fallthru
      _
    // Predicated region
    $region38: #{tpu_custom_call.1} parent=1 // pred_check
      _
    $region39: #{tpu_custom_call.1} parent=1 // pred_check_branch
      %75 = sbr.rel (0) target = $region41
    $region40: #{tpu_custom_call.1} parent=1 // pred_region
      %76 = dma.done [#allocation7], 2048
    $region41: #{tpu_custom_call.1} parent=1 // pred_fallthru
      _
    // Predicated region
    $region42: #{tpu_custom_call.1} parent=1 // pred_check
      _
    $region43: #{tpu_custom_call.1} parent=1 // pred_check_branch
      %78 = sbr.rel (0) target = $region45
    $region44: #{tpu_custom_call.1} parent=1 // pred_region
      %79 = dma.done [#allocation10], 2048
    $region45: #{tpu_custom_call.1} parent=1 // pred_fallthru
      _
    %p81 = scmp.eq.s32.totalorder 0, 0
    // Predicated region
    $region46: #{tpu_custom_call.1} parent=1 // pred_check
      %p82 = pneg %p81
    $region47: #{tpu_custom_call.1} parent=1 // pred_check_branch
      %84 = sbr.rel (%p82) target = $region49
    $region48: #{tpu_custom_call.1} parent=1 // pred_region
      %v85 = vld [vmem:[#allocation3] sm:$0xff]
      %v86 = vld [vmem:[#allocation3 + $0x8] sm:$0xff]
      %87 = vadd.xlane.f32.xlu0 %v85
      %v88 = vpop.xlane.xlu0 %87
      %89 = vadd.xlane.f32.xlu0 %v86
      %v90 = vpop.xlane.xlu0 %89
      %v91 = vrcp.pop 128.0
      %v92 = vmul.f32 %v88, %v91
      %v93 = vmul.f32 %v90, %v91
      %v94 = vsub.f32 %v85, %v92
      %v95 = vsub.f32 %v86, %v93
      %v96 = vmul.f32 %v94, %v94
      %v97 = vmul.f32 %v95, %v95
      %98 = vadd.xlane.f32.xlu0 %v96
      %v99 = vpop.xlane.xlu0 %98
      %100 = vadd.xlane.f32.xlu0 %v97
      %v101 = vpop.xlane.xlu0 %100
      %v102 = vmul.f32 %v99, %v91
      %v103 = vmul.f32 %v101, %v91
      %v104 = vadd.f32 %v102, 1e-05
      %v105 = vadd.f32 %v103, 1e-05
      %v106 = vrsqrt.pop %v104
      %v107 = vrsqrt.pop %v105
      %v108 = vld [vmem:[%s1] sm:$0x1]
      %v110 = vlaneseq
      %v111 = vshrl.u32 %v110, 7
      %v112 = vsub.s32 0, %v111
      %v113 = vrot.slane %v108, %v112
      %v115 = vmul.f32 %v106, %v113
      %v116 = vmul.f32 %v107, %v113
      %v117 = vmul.f32 %v94, %v115
      %v118 = vmul.f32 %v95, %v116
      %v119 = vld [vmem:[#allocation6] sm:$0x1]
      %v121 = vlaneseq
      %v122 = vshrl.u32 %v121, 7
      %v123 = vsub.s32 0, %v122
      %v124 = vrot.slane %v119, %v123
      %v126 = vadd.f32 %v117, %v124
      %v127 = vadd.f32 %v118, %v124
      %v128 = vpack.c.bf16 %v127, %v126
      %v130 = vunpack.c.l.b16 %v128
      %v131 = vunpack.c.h.b16 %v128
      %v132 = vpack.c.b16 %v130, %v130
      %v133 = vpack.c.b16 %v131, %v131
      %136 = vst [vmem:[#allocation2] sm:$0xf] %v132
      %137 = vst [vmem:[#allocation2 + $0x4] sm:$0xf] %v133
      %v138 = vld [vmem:[%s6] sm:$0x1]
      %v140 = vlaneseq
      %v141 = vshrl.u32 %v140, 7
      %v142 = vsub.s32 0, %v141
      %v143 = vrot.slane %v138, %v142
      %145 = vst [vmem:[#allocation11] sm:$0xff] %v143
      %146 = vst [vmem:[#allocation11 + $0x8] sm:$0xff] %v143
    $region49: #{tpu_custom_call.1} parent=1 // pred_fallthru
      _
    %v147 = vld [vmem:[#allocation2] sm:$0xf]
    %v148 = vld [vmem:[#allocation2 + $0x4] sm:$0xf]
    %v149 = vld [vmem:[#allocation8] sm:$0xff]
    %v150 = vld [vmem:[#allocation8 + $0x8] sm:$0xff]
    %v151 = vld [vmem:[#allocation8 + $0x10] sm:$0xff]
    %v152 = vld [vmem:[#allocation8 + $0x18] sm:$0xff]
    %v153 = vld [vmem:[#allocation8 + $0x20] sm:$0xff]
    %v154 = vld [vmem:[#allocation8 + $0x28] sm:$0xff]
    %v155 = vld [vmem:[#allocation8 + $0x30] sm:$0xff]
    %v156 = vld [vmem:[#allocation8 + $0x38] sm:$0xff]
    %v157 = vld [vmem:[#allocation8 + $0x40] sm:$0xff]
    %v158 = vld [vmem:[#allocation8 + $0x48] sm:$0xff]
    %v159 = vld [vmem:[#allocation8 + $0x50] sm:$0xff]
    %v160 = vld [vmem:[#allocation8 + $0x58] sm:$0xff]
    %v161 = vld [vmem:[#allocation8 + $0x60] sm:$0xff]
    %v162 = vld [vmem:[#allocation8 + $0x68] sm:$0xff]
    %v163 = vld [vmem:[#allocation8 + $0x70] sm:$0xff]
    %v164 = vld [vmem:[#allocation8 + $0x78] sm:$0xff]
    %v165 = vld [vmem:[%s4] sm:$0x3]
    %v167 = vlaneseq
    %v168 = vshrl.u32 %v167, 7
    %v169 = vsub.s32 0, %v168
    %v170 = vrot.slane %v165, %v169
    %v171 = vlaneseq
    %v172 = vshrl.u32 %v171, 7
    %v173 = vsub.s32 1, %v172
    %v174 = vrot.slane %v165, %v173
    %v179 = vunpack.c.l.b16 %v147
    %v180 = vunpack.c.l.b16 %v148
    %v181 = vpack.c.b16 %v180, %v179
    %v199 = vunpack.c.l.b16 %v149
    %v200 = vunpack.c.h.b16 %v149
    %v201 = vunpack.c.l.b16 %v150
    %v202 = vunpack.c.h.b16 %v150
    %v203 = vunpack.c.l.b16 %v151
    %v204 = vunpack.c.h.b16 %v151
    %v205 = vunpack.c.l.b16 %v152
    %v206 = vunpack.c.h.b16 %v152
    %v207 = vunpack.c.l.b16 %v153
    %v208 = vunpack.c.h.b16 %v153
    %v209 = vunpack.c.l.b16 %v154
    %v210 = vunpack.c.h.b16 %v154
    %v211 = vunpack.c.l.b16 %v155
    %v212 = vunpack.c.h.b16 %v155
    %v213 = vunpack.c.l.b16 %v156
    %v214 = vunpack.c.h.b16 %v156
    %v215 = vunpack.c.l.b16 %v157
    %v216 = vunpack.c.h.b16 %v157
    %v217 = vunpack.c.l.b16 %v158
    %v218 = vunpack.c.h.b16 %v158
    %v219 = vunpack.c.l.b16 %v159
    %v220 = vunpack.c.h.b16 %v159
    %v221 = vunpack.c.l.b16 %v160
    %v222 = vunpack.c.h.b16 %v160
    %v223 = vunpack.c.l.b16 %v161
    %v224 = vunpack.c.h.b16 %v161
    %v225 = vunpack.c.l.b16 %v162
    %v226 = vunpack.c.h.b16 %v162
    %v227 = vunpack.c.l.b16 %v163
    %v228 = vunpack.c.h.b16 %v163
    %v229 = vunpack.c.l.b16 %v164
    %v230 = vunpack.c.h.b16 %v164
    %v231 = vpack.c.b16 %v201, %v199
    %v232 = vpack.c.b16 %v202, %v200
    %v233 = vpack.c.b16 %v205, %v203
    %v234 = vpack.c.b16 %v206, %v204
    %v235 = vpack.c.b16 %v209, %v207
    %v236 = vpack.c.b16 %v210, %v208
    %v237 = vpack.c.b16 %v213, %v211
    %v238 = vpack.c.b16 %v214, %v212
    %v239 = vpack.c.b16 %v217, %v215
    %v240 = vpack.c.b16 %v218, %v216
    %v241 = vpack.c.b16 %v221, %v219
    %v242 = vpack.c.b16 %v222, %v220
    %v243 = vpack.c.b16 %v225, %v223
    %v244 = vpack.c.b16 %v226, %v224
    %v245 = vpack.c.b16 %v229, %v227
    %v246 = vpack.c.b16 %v230, %v228
    %263 = vmatprep.subr.bf16.mxu0 %v246
    %264 = vmatpush1.bf16.msra.mxu0 %v245
    %265 = vmatprep.subr.bf16.mxu0 %v244
    %266 = vmatpush1.bf16.msra.mxu0 %v243
    %267 = vmatprep.subr.bf16.mxu0 %v242
    %268 = vmatpush1.bf16.msra.mxu0 %v241
    %269 = vmatprep.subr.bf16.mxu0 %v240
    %270 = vmatpush1.bf16.msra.mxu0 %v239
    %271 = vmatprep.subr.bf16.mxu0 %v238
    %272 = vmatpush1.bf16.msra.mxu0 %v237
    %273 = vmatprep.subr.bf16.mxu0 %v236
    %274 = vmatpush1.bf16.msra.mxu0 %v235
    %275 = vmatprep.subr.bf16.mxu0 %v234
    %276 = vmatpush1.bf16.msra.mxu0 %v233
    %277 = vmatprep.subr.bf16.mxu0 %v232
    %278 = vmatpush1.bf16.msra.mxu0 %v231
    %279 = vmatprep.subr.bf16.mxu0 0
    %280 = vmatpush2.bf16.msra.mxu0 0
    %281 = vmatprep.subr.bf16.mxu0 0
    %282 = vmatpush2.bf16.msra.mxu0 0
    %283 = vmatprep.subr.bf16.mxu0 0
    %284 = vmatpush2.bf16.msra.mxu0 0
    %285 = vmatprep.subr.bf16.mxu0 0
    %286 = vmatpush2.bf16.msra.mxu0 0
    %287 = vmatprep.subr.bf16.mxu0 0
    %288 = vmatpush2.bf16.msra.mxu0 0
    %289 = vmatprep.subr.bf16.mxu0 0
    %290 = vmatpush2.bf16.msra.mxu0 0
    %291 = vmatprep.subr.bf16.mxu0 0
    %292 = vmatpush2.bf16.msra.mxu0 0
    %293 = vmatprep.subr.bf16.mxu0 0
    %294 = vmatpush2.bf16.msra.mxu0 0
    %295 = vmatprep.mubr.bf16.mxu0 0
    %296 = vmatmul.mubr.bf16.gmra.mxu0 %v181
    %v297 = vpop.f32.mrf.mxu0
    %v298 = vadd.f32 %v170, %v297
    %v299 = vpop.f32.mrf.mxu0
    %v300 = vadd.f32 %v174, %v299
    %v301 = vpop.f32.mrf.mxu0
    %v302 = vadd.f32 %v170, %v301
    %v303 = vpop.f32.mrf.mxu0
    %v304 = vadd.f32 %v174, %v303
    %305 = vdwg.mxu0
    %v306 = vmul.f32 %v298, 0.5
    %v307 = vmul.f32 %v300, 0.5
    %v308 = vmul.f32 %v302, 0.5
    %v309 = vmul.f32 %v304, 0.5
    %v310 = vmul.f32 %v298, 0.70710677
    %v311 = vmul.f32 %v300, 0.70710677
    %v312 = vmul.f32 %v302, 0.70710677
    %v313 = vmul.f32 %v304, 0.70710677
    %v314 = verf.f32.pop %v310
    %v315 = verf.f32.pop %v311
    %v316 = verf.f32.pop %v312
    %v317 = verf.f32.pop %v313
    %v318 = vadd.f32 %v314, 1.0
    %v319 = vadd.f32 %v315, 1.0
    %v320 = vadd.f32 %v316, 1.0
    %v321 = vadd.f32 %v317, 1.0
    %v322 = vmul.f32 %v306, %v318
    %v323 = vmul.f32 %v307, %v319
    %v324 = vmul.f32 %v308, %v320
    %v325 = vmul.f32 %v309, %v321
    %v326 = vld [vmem:[#allocation11] sm:$0xff]
    %v327 = vld [vmem:[#allocation11 + $0x8] sm:$0xff]
    %v328 = vpack.c.bf16 %v324, %v322
    %v329 = vpack.c.bf16 %v325, %v323
    %v330 = vld [vmem:[#allocation9] sm:$0xf]
    %v331 = vld [vmem:[#allocation9 + $0x4] sm:$0xf]
    %v332 = vld [vmem:[#allocation9 + $0x8] sm:$0xf]
    %v333 = vld [vmem:[#allocation9 + $0xc] sm:$0xf]
    %v334 = vld [vmem:[#allocation9 + $0x10] sm:$0xf]
    %v335 = vld [vmem:[#allocation9 + $0x14] sm:$0xf]
    %v336 = vld [vmem:[#allocation9 + $0x18] sm:$0xf]
    %v337 = vld [vmem:[#allocation9 + $0x1c] sm:$0xf]
    %v338 = vld [vmem:[#allocation9 + $0x20] sm:$0xf]
    %v339 = vld [vmem:[#allocation9 + $0x24] sm:$0xf]
    %v340 = vld [vmem:[#allocation9 + $0x28] sm:$0xf]
    %v341 = vld [vmem:[#allocation9 + $0x2c] sm:$0xf]
    %v342 = vld [vmem:[#allocation9 + $0x30] sm:$0xf]
    %v343 = vld [vmem:[#allocation9 + $0x34] sm:$0xf]
    %v344 = vld [vmem:[#allocation9 + $0x38] sm:$0xf]
    %v345 = vld [vmem:[#allocation9 + $0x3c] sm:$0xf]
    %v346 = vld [vmem:[#allocation9 + $0x40] sm:$0xf]
    %v347 = vld [vmem:[#allocation9 + $0x44] sm:$0xf]
    %v348 = vld [vmem:[#allocation9 + $0x48] sm:$0xf]
    %v349 = vld [vmem:[#allocation9 + $0x4c] sm:$0xf]
    %v350 = vld [vmem:[#allocation9 + $0x50] sm:$0xf]
    %v351 = vld [vmem:[#allocation9 + $0x54] sm:$0xf]
    %v352 = vld [vmem:[#allocation9 + $0x58] sm:$0xf]
    %v353 = vld [vmem:[#allocation9 + $0x5c] sm:$0xf]
    %v354 = vld [vmem:[#allocation9 + $0x60] sm:$0xf]
    %v355 = vld [vmem:[#allocation9 + $0x64] sm:$0xf]
    %v356 = vld [vmem:[#allocation9 + $0x68] sm:$0xf]
    %v357 = vld [vmem:[#allocation9 + $0x6c] sm:$0xf]
    %v358 = vld [vmem:[#allocation9 + $0x70] sm:$0xf]
    %v359 = vld [vmem:[#allocation9 + $0x74] sm:$0xf]
    %v360 = vld [vmem:[#allocation9 + $0x78] sm:$0xf]
    %v361 = vld [vmem:[#allocation9 + $0x7c] sm:$0xf]
    %v394 = vunpack.c.l.b16 %v330
    %v395 = vunpack.c.l.b16 %v331
    %v396 = vunpack.c.l.b16 %v332
    %v397 = vunpack.c.l.b16 %v333
    %v398 = vunpack.c.l.b16 %v334
    %v399 = vunpack.c.l.b16 %v335
    %v400 = vunpack.c.l.b16 %v336
    %v401 = vunpack.c.l.b16 %v337
    %v402 = vunpack.c.l.b16 %v338
    %v403 = vunpack.c.l.b16 %v339
    %v404 = vunpack.c.l.b16 %v340
    %v405 = vunpack.c.l.b16 %v341
    %v406 = vunpack.c.l.b16 %v342
    %v407 = vunpack.c.l.b16 %v343
    %v408 = vunpack.c.l.b16 %v344
    %v409 = vunpack.c.l.b16 %v345
    %v410 = vunpack.c.l.b16 %v346
    %v411 = vunpack.c.l.b16 %v347
    %v412 = vunpack.c.l.b16 %v348
    %v413 = vunpack.c.l.b16 %v349
    %v414 = vunpack.c.l.b16 %v350
    %v415 = vunpack.c.l.b16 %v351
    %v416 = vunpack.c.l.b16 %v352
    %v417 = vunpack.c.l.b16 %v353
    %v418 = vunpack.c.l.b16 %v354
    %v419 = vunpack.c.l.b16 %v355
    %v420 = vunpack.c.l.b16 %v356
    %v421 = vunpack.c.l.b16 %v357
    %v422 = vunpack.c.l.b16 %v358
    %v423 = vunpack.c.l.b16 %v359
    %v424 = vunpack.c.l.b16 %v360
    %v425 = vunpack.c.l.b16 %v361
    %v426 = vpack.c.b16 %v395, %v394
    %v427 = vpack.c.b16 %v397, %v396
    %v428 = vpack.c.b16 %v399, %v398
    %v429 = vpack.c.b16 %v401, %v400
    %v430 = vpack.c.b16 %v403, %v402
    %v431 = vpack.c.b16 %v405, %v404
    %v432 = vpack.c.b16 %v407, %v406
    %v433 = vpack.c.b16 %v409, %v408
    %v434 = vpack.c.b16 %v411, %v410
    %v435 = vpack.c.b16 %v413, %v412
    %v436 = vpack.c.b16 %v415, %v414
    %v437 = vpack.c.b16 %v417, %v416
    %v438 = vpack.c.b16 %v419, %v418
    %v439 = vpack.c.b16 %v421, %v420
    %v440 = vpack.c.b16 %v423, %v422
    %v441 = vpack.c.b16 %v425, %v424
    %458 = vmatprep.subr.bf16.mxu0 0
    %459 = vmatpush1.bf16.msra.mxu0 %v433
    %460 = vmatprep.subr.bf16.mxu0 0
    %461 = vmatpush1.bf16.msra.mxu0 %v432
    %462 = vmatprep.subr.bf16.mxu0 0
    %463 = vmatpush1.bf16.msra.mxu0 %v431
    %464 = vmatprep.subr.bf16.mxu0 0
    %465 = vmatpush1.bf16.msra.mxu0 %v430
    %466 = vmatprep.subr.bf16.mxu0 0
    %467 = vmatpush1.bf16.msra.mxu0 %v429
    %468 = vmatprep.subr.bf16.mxu0 0
    %469 = vmatpush1.bf16.msra.mxu0 %v428
    %470 = vmatprep.subr.bf16.mxu0 0
    %471 = vmatpush1.bf16.msra.mxu0 %v427
    %472 = vmatprep.subr.bf16.mxu0 0
    %473 = vmatpush1.bf16.msra.mxu0 %v426
    %474 = vmatprep.subr.bf16.mxu0 0
    %475 = vmatpush2.bf16.msra.mxu0 %v441
    %476 = vmatprep.subr.bf16.mxu0 0
    %477 = vmatpush2.bf16.msra.mxu0 %v440
    %478 = vmatprep.subr.bf16.mxu0 0
    %479 = vmatpush2.bf16.msra.mxu0 %v439
    %480 = vmatprep.subr.bf16.mxu0 0
    %481 = vmatpush2.bf16.msra.mxu0 %v438
    %482 = vmatprep.subr.bf16.mxu0 0
    %483 = vmatpush2.bf16.msra.mxu0 %v437
    %484 = vmatprep.subr.bf16.mxu0 0
    %485 = vmatpush2.bf16.msra.mxu0 %v436
    %486 = vmatprep.subr.bf16.mxu0 0
    %487 = vmatpush2.bf16.msra.mxu0 %v435
    %488 = vmatprep.subr.bf16.mxu0 0
    %489 = vmatpush2.bf16.msra.mxu0 %v434
    %490 = vmatprep.mubr.bf16.mxu0 %v329
    %491 = vmatmul.mubr.bf16.gmra.mxu0 %v328
    %v492 = vpop.f32.mrf.mxu0
    %v493 = vadd.f32 0.0, %v492
    %v494 = vpop.f32.mrf.mxu0
    %v495 = vpop.f32.mrf.mxu0
    %v496 = vadd.f32 0.0, %v495
    %v497 = vpop.f32.mrf.mxu0
    %498 = vdwg.mxu0
    %v499 = vadd.f32 %v326, %v493
    %v500 = vadd.f32 %v327, %v496
    %501 = vst [vmem:[#allocation11] sm:$0xff] %v499
    %502 = vst [vmem:[#allocation11 + $0x8] sm:$0xff] %v500
    // Predicated region
    $region50: #{tpu_custom_call.1} parent=1 // pred_check
      _
    $region51: #{tpu_custom_call.1} parent=1 // pred_check_branch
      %504 = sbr.rel (0) target = $region53
    $region52: #{tpu_custom_call.1} parent=1 // pred_region
      %s506 = ssub.s32 256, 256
      %507 = vsyncadd [#allocation5], %s506
      %s508 = sshll.u32 [#allocation11], 4
      %s509 = int_to_ptr.vmem [resolvable:$true] %s508
      %514 = dma.vmem_to_hbm [thread:$0]  %s509, 256, %s7, [#allocation5], 128, 128, 8
    $region53: #{tpu_custom_call.1} parent=1 // pred_fallthru
      _
    // Predicated region
    $region54: #{tpu_custom_call.1} parent=1 // pred_check
      _
    $region55: #{tpu_custom_call.1} parent=1 // pred_check_branch
      %516 = sbr.rel (0) target = $region57
    $region56: #{tpu_custom_call.1} parent=1 // pred_region
      %517 = dma.done [#allocation5], 256
    $region57: #{tpu_custom_call.1} parent=1 // pred_fallthru
      _
    %518 = vsyncpa [#allocation4], 1
    %519 = vsyncpa [#allocation7], 1
    %520 = vsyncpa [#allocation10], 1
    %521 = vsyncpa [#allocation5], 1

</llo_original>
